<compile_context>
chip_gen: v6e
topology: v6e:2x2x1
jax: 0.10.0
libtpu: 0.0.40
codegen_flags: <defaults>
</compile_context>

<pallas_src>
import jax
import jax.numpy as jnp
from jax.experimental import pallas as pl
from jax.experimental.pallas import tpu as pltpu

LOG_STD_MIN = -5.0
LOG_STD_MAX = 2.0


def _round_up(x, m):
    return ((x + m - 1) // m) * m


# --------------------------------------------------------------------------
# Kernels
# --------------------------------------------------------------------------
def _policy_kernel_fused(x_ref, w1_ref, b1_ref, w2_ref, b2_ref, w3_ref,
                         b3c_ref, out_ref):
    """Small-H path: L1 column-concat, L2/L3 block-diagonal -> 3 matmuls.

    b3c_ref is [3, 2A]: row 0 = fused bias, row 1 = per-column lower clamp
    (-inf on mean columns), row 2 = per-column upper clamp (+inf on mean
    columns).  The min/max pair replaces the previous iota/compare/select.
    """
    h = jnp.dot(x_ref[...], w1_ref[...],
                preferred_element_type=jnp.float32) + b1_ref[...]
    h = jnp.maximum(h, 0.0).astype(w2_ref.dtype)
    h = jnp.dot(h, w2_ref[...],
                preferred_element_type=jnp.float32) + b2_ref[...]
    h = jnp.maximum(h, 0.0).astype(w3_ref.dtype)
    out = jnp.dot(h, w3_ref[...],
                  preferred_element_type=jnp.float32) + b3c_ref[0:1, :]
    out_ref[...] = jnp.minimum(jnp.maximum(out, b3c_ref[1:2, :]),
                               b3c_ref[2:3, :])


def _policy_kernel_split(x_ref, w1_ref, b1_ref,
                         w2m_ref, b2m_ref, w3m_ref, b3m_ref,
                         w2s_ref, b2s_ref, w3s_ref, b3s_ref,
                         mean_ref, log_std_ref):
    """Large-H path: shared concatenated L1, then two dense per-branch L2/L3
    matmuls (no block-diagonal zero padding -> no wasted MXU FLOPs)."""
    H = w2m_ref.shape[0]  # hidden_size (multiple of 128 -> lane-aligned slice)

    h = jnp.dot(x_ref[...], w1_ref[...],
                preferred_element_type=jnp.float32) + b1_ref[...]
    h = jnp.maximum(h, 0.0)
    hm = h[:, :H].astype(w2m_ref.dtype)
    hs = h[:, H:].astype(w2s_ref.dtype)

    # mean branch
    hm = jnp.dot(hm, w2m_ref[...],
                 preferred_element_type=jnp.float32) + b2m_ref[...]
    hm = jnp.maximum(hm, 0.0).astype(w3m_ref.dtype)
    mean_ref[...] = jnp.dot(hm, w3m_ref[...],
                            preferred_element_type=jnp.float32) + b3m_ref[...]

    # log_std branch
    hs = jnp.dot(hs, w2s_ref[...],
                 preferred_element_type=jnp.float32) + b2s_ref[...]
    hs = jnp.maximum(hs, 0.0).astype(w3s_ref.dtype)
    ls = jnp.dot(hs, w3s_ref[...],
                 preferred_element_type=jnp.float32) + b3s_ref[...]
    log_std_ref[...] = jnp.clip(ls, LOG_STD_MIN, LOG_STD_MAX)


# --------------------------------------------------------------------------
# Wrapper
# --------------------------------------------------------------------------
def _pick_batch_tile(batch, num_inputs, h2, two_a, in_itemsize, block_b):
    """Batch-tile rows per grid step.

    * multiple of 8 sublanes (or == batch when batch < 8, full-dim block);
    * as large as possible (per-step overhead ~0.35us dominates small tiles),
      capped at block_b and at a ~20 MiB VMEM working-set estimate so the
      default scoped-VMEM limit is never exceeded;
    * at most ceil(batch/2) so the grid has >= 2 steps whenever possible and
      dimension_semantics=("parallel",) can engage both v7x TensorCores.
    """
    if batch <= 8:
        return batch
    tb = min(_round_up(block_b, 8), _round_up(-(-batch // 2), 8))
    # streamed state + output double-buffered; hidden activations are f32
    per_row = 2 * num_inputs * in_itemsize + 2 * two_a * 4 + 2 * h2 * 4
    vmem_rows = max(8, ((20 << 20) // per_row) // 8 * 8)
    return max(8, min(tb, vmem_rows))


def policy_forward(state, fused, *, block_b=8192):
    """state: [B, num_inputs]. fused: dict from fuse_params(). Returns
    (mean, log_std), both [B, num_actions] float32."""
    layout = fused["layout"]
    B, num_inputs = state.shape
    w_dtype = fused["w1"].dtype
    h2 = fused["w1"].shape[1]                       # 2 * hidden_size
    if layout == "fused":
        two_a = fused["w3"].shape[1]                # 2 * num_actions
    else:
        two_a = 2 * fused["w3m"].shape[1]
    num_actions = two_a // 2

    # Stream the state in the weight dtype (bf16 halves the dominant HBM
    # stream).  Ideally the caller already provides bf16 state so this cast
    # is a no-op; otherwise it is a one-time convenience conversion.
    if state.dtype != w_dtype:
        state = state.astype(w_dtype)

    tb = _pick_batch_tile(B, num_inputs, h2, two_a, state.dtype.itemsize,
                          block_b)
    # No wrapper-side padding: Pallas masks the partial boundary block.  The
    # garbage rows of that block flow through matmul/ReLU/clamp but are never
    # stored to HBM, and there is no cross-row reduction -> safe.
    grid = (pl.cdiv(B, tb),)

    const2 = lambda i: (0, 0)   # weights/biases stay resident across the grid

    param_bytes = sum(int(v.size) * v.dtype.itemsize
                      for k, v in fused.items() if k != "layout")
    if layout == "fused":
        flops = 2 * B * (num_inputs * h2 + h2 * h2 + h2 * two_a)
    else:
        flops = 2 * B * (num_inputs * h2 + h2 * (h2 // 2) + h2 * num_actions)
    cost = pl.CostEstimate(
        flops=flops, transcendentals=0,
        bytes_accessed=param_bytes + B * num_inputs * state.dtype.itemsize
        + B * two_a * 4)

    def _call(single_buffer_weights):
        def wspec(shape):
            if single_buffer_weights:
                # Constant-index blocks never change across the grid; one VMEM
                # buffer suffices (halves resident-weight VMEM).
                return pl.BlockSpec(shape, const2,
                                    pipeline_mode=pl.Buffered(1))
            return pl.BlockSpec(shape, const2)

        x_spec = pl.BlockSpec((tb, num_inputs), lambda i: (i, 0))

        if layout == "fused":
            kernel = _policy_kernel_fused
            param_keys = ("w1", "b1", "w2", "b2", "w3", "b3c")
            out_shape = jax.ShapeDtypeStruct((B, two_a), jnp.float32)
            out_specs = pl.BlockSpec((tb, two_a), lambda i: (i, 0))
        else:
            kernel = _policy_kernel_split
            param_keys = ("w1", "b1", "w2m", "b2m", "w3m", "b3m",
                          "w2s", "b2s", "w3s", "b3s")
            out_shape = (jax.ShapeDtypeStruct((B, num_actions), jnp.float32),
                         jax.ShapeDtypeStruct((B, num_actions), jnp.float32))
            out_specs = (pl.BlockSpec((tb, num_actions), lambda i: (i, 0)),
                         pl.BlockSpec((tb, num_actions), lambda i: (i, 0)))

        in_specs = [x_spec] + [wspec(fused[k].shape) for k in param_keys]
        args = (state,) + tuple(fused[k] for k in param_keys)

        return pl.pallas_call(
            kernel,
            out_shape=out_shape,
            grid=grid,
            in_specs=in_specs,
            out_specs=out_specs,
            compiler_params=pltpu.CompilerParams(
                dimension_semantics=("parallel",)),
            cost_estimate=cost,
        )(*args)

    try:
        out = _call(True)
    except Exception:
        # pipeline_mode=pl.Buffered(1) not supported by this jax/libtpu build;
        # fall back to default double-buffered constant blocks (correct,
        # slightly more VMEM).
        out = _call(False)

    if layout == "fused":
        return out[:, :num_actions], out[:, num_actions:]
    return out  # (mean, log_std)


# --------------------------------------------------------------------------
# Parameter construction
# --------------------------------------------------------------------------
def init_params(key, num_inputs, num_actions, hidden_size, init_w=0.003):
    """Per-branch params mirroring the PyTorch module's Linear layers.

    nn.Linear(in, out) weight (out, in) is stored transposed as (in, out).
    Note: the reference module accepts init_w but never applies it (its
    Sequential layers use default nn.Linear init), so init_w is intentionally
    unused here as well to match the spec exactly.
    """
    keys = jax.random.split(key, 12)

    def linear(kw, kb, fan_in, fan_out):
        bound = 1.0 / jnp.sqrt(float(fan_in))
        w = jax.random.uniform(kw, (fan_in, fan_out), jnp.float32, -bound, bound)
        b = jax.random.uniform(kb, (1, fan_out), jnp.float32, -bound, bound)
        return w, b

    p = {}
    # mean branch
    p["w1m"], p["b1m"] = linear(keys[0], keys[1], num_inputs, hidden_size)
    p["w2m"], p["b2m"] = linear(keys[2], keys[3], hidden_size, hidden_size)
    p["w3m"], p["b3m"] = linear(keys[4], keys[5], hidden_size, num_actions)
    # log_std branch
    p["w1s"], p["b1s"] = linear(keys[6], keys[7], num_inputs, hidden_size)
    p["w2s"], p["b2s"] = linear(keys[8], keys[9], hidden_size, hidden_size)
    p["w3s"], p["b3s"] = linear(keys[10], keys[11], hidden_size, num_actions)
    return p


def fuse_params(p, dtype=jnp.bfloat16, split_hidden_threshold=128):
    """Pack per-branch params for the kernel.

    Small hidden sizes use a block-diagonal L2/L3 ("fused" layout) so the
    whole forward is 3 matmuls (the zero blocks are free when 2H fits one MXU
    tile).  For H >= split_hidden_threshold (and H a multiple of 128) the
    zeros would waste half the MXU FLOPs / weight bytes, so the "split"
    layout keeps L2/L3 as dense per-branch matmuls; L1 is always
    column-concatenated (adds no zeros).

    Weights are cast to `dtype` (bf16 default: halves HBM + VMEM); biases
    stay f32 (bias-add / ReLU run on the f32 MXU accumulator).
    """
    H = p["w2m"].shape[0]
    A = p["w3m"].shape[1]

    w1 = jnp.concatenate([p["w1m"], p["w1s"]], axis=1).astype(dtype)  # [in,2H]
    b1 = jnp.concatenate([p["b1m"], p["b1s"]], axis=1)                # [1, 2H]

    if H >= split_hidden_threshold and H % 128 == 0:
        return {
            "layout": "split",
            "w1": w1, "b1": b1,
            "w2m": p["w2m"].astype(dtype), "b2m": p["b2m"],
            "w3m": p["w3m"].astype(dtype), "b3m": p["b3m"],
            "w2s": p["w2s"].astype(dtype), "b2s": p["b2s"],
            "w3s": p["w3s"].astype(dtype), "b3s": p["b3s"],
        }

    zHH = jnp.zeros((H, H), jnp.float32)
    zHA = jnp.zeros((H, A), jnp.float32)
    w2 = jnp.block([[p["w2m"], zHH], [zHH, p["w2s"]]]).astype(dtype)  # [2H,2H]
    b2 = jnp.concatenate([p["b2m"], p["b2s"]], axis=1)                # [1, 2H]
    w3 = jnp.block([[p["w3m"], zHA], [zHA, p["w3s"]]]).astype(dtype)  # [2H,2A]
    b3 = jnp.concatenate([p["b3m"], p["b3s"]], axis=1)                # [1, 2A]
    lo = jnp.concatenate([jnp.full((1, A), -jnp.inf, jnp.float32),
                          jnp.full((1, A), LOG_STD_MIN, jnp.float32)], axis=1)
    hi = jnp.concatenate([jnp.full((1, A), jnp.inf, jnp.float32),
                          jnp.full((1, A), LOG_STD_MAX, jnp.float32)], axis=1)
    b3c = jnp.concatenate([b3, lo, hi], axis=0)                       # [3, 2A]
    return {"layout": "fused",
            "w1": w1, "b1": b1, "w2": w2, "b2": b2, "w3": w3, "b3c": b3c}


# --------------------------------------------------------------------------
# Pure-JAX reference (unfused) for correctness checks
# --------------------------------------------------------------------------
def _reference_forward(state, params):
    def mlp3(x, w1, b1, w2, b2, w3, b3):
        h = jnp.maximum(x @ w1 + b1, 0.0)
        h = jnp.maximum(h @ w2 + b2, 0.0)
        return h @ w3 + b3

    mean = mlp3(state, params["w1m"], params["b1m"], params["w2m"],
                params["b2m"], params["w3m"], params["b3m"])
    ls = mlp3(state, params["w1s"], params["b1s"], params["w2s"],
              params["b2s"], params["w3s"], params["b3s"])
    return mean, jnp.clip(ls, LOG_STD_MIN, LOG_STD_MAX)


if __name__ == "__main__":
    key = jax.random.PRNGKey(0)
    k1, k2, k3, k4 = jax.random.split(key, 4)

    # ---- Small shapes: block-diagonal "fused" path (H=32) ---------------
    num_inputs, num_actions, hidden_size, batch = 16, 4, 32, 8
    params = init_params(k1, num_inputs, num_actions, hidden_size)
    state = jax.random.normal(k2, (batch, num_inputs), jnp.float32)
    mean_ref, log_std_ref = _reference_forward(state, params)

    # f32 weights: exact check against the unfused reference
    fused_f32 = fuse_params(params, dtype=jnp.float32)
    mean, log_std = policy_forward(state, fused_f32)
    jax.block_until_ready((mean, log_std))
    assert mean.shape == (batch, num_actions)
    assert log_std.shape == (batch, num_actions)
    assert jnp.allclose(mean, mean_ref, atol=1e-5, rtol=1e-5)
    assert jnp.allclose(log_std, log_std_ref, atol=1e-5, rtol=1e-5)
    assert float(log_std.min()) >= LOG_STD_MIN - 1e-6
    assert float(log_std.max()) <= LOG_STD_MAX + 1e-6

    # bf16 weight/state streams (production default): loose tolerance
    fused_bf16 = fuse_params(params, dtype=jnp.bfloat16)
    mean_b, log_std_b = policy_forward(state, fused_bf16)
    jax.block_until_ready((mean_b, log_std_b))
    assert jnp.allclose(mean_b, mean_ref, atol=5e-2, rtol=5e-2)
    assert jnp.allclose(log_std_b, log_std_ref, atol=5e-2, rtol=5e-2)

    # ---- Larger hidden size: dense per-branch "split" path, and an odd
    # batch exercises the un-padded partial boundary block. ---------------
    hidden2, batch2 = 128, 20
    params2 = init_params(k3, num_inputs, num_actions, hidden2)
    state2 = jax.random.normal(k4, (batch2, num_inputs), jnp.float32)
    fused2 = fuse_params(params2, dtype=jnp.float32)
    assert fused2["layout"] == "split"
    mean2, log_std2 = policy_forward(state2, fused2)
    jax.block_until_ready((mean2, log_std2))
    mean2_ref, log_std2_ref = _reference_forward(state2, params2)
    assert mean2.shape == (batch2, num_actions)
    assert jnp.allclose(mean2, mean2_ref, atol=1e-5, rtol=1e-5)
    assert jnp.allclose(log_std2, log_std2_ref, atol=1e-5, rtol=1e-5)

    print("KERNEL_OK")
</pallas_src>

<mosaic_0001>
module attributes {stable_mosaic.version = 11 : i64} {
  func.func @_policy_kernel_fused(%arg0: i32, %arg1: memref<8x16xf32, #tpu.memory_space<vmem>>, %arg2: memref<16x64xf32, #tpu.memory_space<vmem>>, %arg3: memref<1x64xf32, #tpu.memory_space<vmem>>, %arg4: memref<64x64xf32, #tpu.memory_space<vmem>>, %arg5: memref<1x64xf32, #tpu.memory_space<vmem>>, %arg6: memref<64x8xf32, #tpu.memory_space<vmem>>, %arg7: memref<3x8xf32, #tpu.memory_space<vmem>>, %arg8: memref<8x8xf32, #tpu.memory_space<vmem>>) attributes {dimension_semantics = [#tpu.dimension_semantics<parallel>], iteration_bounds = array<i64: 1>, scalar_prefetch = 0 : i64, scratch_operands = 0 : i64, tpu.core_type = #tpu.core_type<tc>, window_params = [{transform_indices = @transform_0, window_bounds = array<i64: 8, 16>}, {pipeline_mode = #tpu.pipeline_mode<synchronous>, transform_indices = @transform_1, window_bounds = array<i64: 16, 64>}, {pipeline_mode = #tpu.pipeline_mode<synchronous>, transform_indices = @transform_2, window_bounds = array<i64: 1, 64>}, {pipeline_mode = #tpu.pipeline_mode<synchronous>, transform_indices = @transform_3, window_bounds = array<i64: 64, 64>}, {pipeline_mode = #tpu.pipeline_mode<synchronous>, transform_indices = @transform_4, window_bounds = array<i64: 1, 64>}, {pipeline_mode = #tpu.pipeline_mode<synchronous>, transform_indices = @transform_5, window_bounds = array<i64: 64, 8>}, {pipeline_mode = #tpu.pipeline_mode<synchronous>, transform_indices = @transform_6, window_bounds = array<i64: 3, 8>}, {transform_indices = @transform_7, window_bounds = array<i64: 8, 8>}]} {
    %c0 = arith.constant 0 : index
    %c0_0 = arith.constant 0 : index
    %0 = vector.load %arg1[%c0, %c0_0] : memref<8x16xf32, #tpu.memory_space<vmem>>, vector<8x16xf32>
    %c0_1 = arith.constant 0 : index
    %c0_2 = arith.constant 0 : index
    %1 = vector.load %arg2[%c0_1, %c0_2] : memref<16x64xf32, #tpu.memory_space<vmem>>, vector<16x64xf32>
    %cst = arith.constant dense<0.000000e+00> : vector<8x64xf32>
    %2 = tpu.matmul %0, %1, %cst {dimension_numbers = #tpu.dot_dimension_numbers<[1], [0], [0], [1], [0, 0, 1, 1], [], []>} : vector<8x16xf32>, vector<16x64xf32>, vector<8x64xf32> -> vector<8x64xf32>
    %c0_3 = arith.constant 0 : index
    %c0_4 = arith.constant 0 : index
    %3 = vector.load %arg3[%c0_3, %c0_4] : memref<1x64xf32, #tpu.memory_space<vmem>>, vector<1x64xf32>
    %4 = vector.broadcast %3 : vector<1x64xf32> to vector<8x64xf32>
    %5 = arith.addf %2, %4 : vector<8x64xf32>
    %cst_5 = arith.constant 0.000000e+00 : f32
    %6 = vector.broadcast %cst_5 : f32 to vector<8x64xf32>
    %7 = arith.maximumf %5, %6 : vector<8x64xf32>
    %c0_6 = arith.constant 0 : index
    %c0_7 = arith.constant 0 : index
    %8 = vector.load %arg4[%c0_6, %c0_7] : memref<64x64xf32, #tpu.memory_space<vmem>>, vector<64x64xf32>
    %cst_8 = arith.constant dense<0.000000e+00> : vector<8x64xf32>
    %9 = tpu.matmul %7, %8, %cst_8 {dimension_numbers = #tpu.dot_dimension_numbers<[1], [0], [0], [1], [0, 0, 1, 1], [], []>} : vector<8x64xf32>, vector<64x64xf32>, vector<8x64xf32> -> vector<8x64xf32>
    %c0_9 = arith.constant 0 : index
    %c0_10 = arith.constant 0 : index
    %10 = vector.load %arg5[%c0_9, %c0_10] : memref<1x64xf32, #tpu.memory_space<vmem>>, vector<1x64xf32>
    %11 = vector.broadcast %10 : vector<1x64xf32> to vector<8x64xf32>
    %12 = arith.addf %9, %11 : vector<8x64xf32>
    %cst_11 = arith.constant 0.000000e+00 : f32
    %13 = vector.broadcast %cst_11 : f32 to vector<8x64xf32>
    %14 = arith.maximumf %12, %13 : vector<8x64xf32>
    %c0_12 = arith.constant 0 : index
    %c0_13 = arith.constant 0 : index
    %15 = vector.load %arg6[%c0_12, %c0_13] : memref<64x8xf32, #tpu.memory_space<vmem>>, vector<64x8xf32>
    %cst_14 = arith.constant dense<0.000000e+00> : vector<8x8xf32>
    %16 = tpu.matmul %14, %15, %cst_14 {dimension_numbers = #tpu.dot_dimension_numbers<[1], [0], [0], [1], [0, 0, 1, 1], [], []>} : vector<8x64xf32>, vector<64x8xf32>, vector<8x8xf32> -> vector<8x8xf32>
    %c0_15 = arith.constant 0 : index
    %c0_16 = arith.constant 0 : index
    %17 = vector.load %arg7[%c0_15, %c0_16] : memref<3x8xf32, #tpu.memory_space<vmem>>, vector<1x8xf32>
    %18 = vector.broadcast %17 : vector<1x8xf32> to vector<8x8xf32>
    %19 = arith.addf %16, %18 : vector<8x8xf32>
    %c1 = arith.constant 1 : index
    %c0_17 = arith.constant 0 : index
    %20 = vector.load %arg7[%c1, %c0_17] : memref<3x8xf32, #tpu.memory_space<vmem>>, vector<1x8xf32>
    %21 = vector.broadcast %20 : vector<1x8xf32> to vector<8x8xf32>
    %22 = arith.maximumf %19, %21 : vector<8x8xf32>
    %c2 = arith.constant 2 : index
    %c0_18 = arith.constant 0 : index
    %23 = vector.load %arg7[%c2, %c0_18] : memref<3x8xf32, #tpu.memory_space<vmem>>, vector<1x8xf32>
    %24 = vector.broadcast %23 : vector<1x8xf32> to vector<8x8xf32>
    %25 = arith.minimumf %22, %24 : vector<8x8xf32>
    %c0_19 = arith.constant 0 : index
    %c0_20 = arith.constant 0 : index
    %26 = vector.load %arg8[%c0_19, %c0_20] : memref<8x8xf32, #tpu.memory_space<vmem>>, vector<8x8xf32>
    tpu.vector_store %arg8[%c0_19, %c0_20], %25 {strides = array<i32>} : memref<8x8xf32, #tpu.memory_space<vmem>>, vector<8x8xf32>,
    return
  }
  func.func @transform_0(%arg0: i32) -> (i32, i32) {
    %c0_i32 = arith.constant 0 : i32
    %c0_i32_0 = arith.constant 0 : i32
    return %arg0, %c0_i32 : i32, i32
  }
  func.func @transform_1(%arg0: i32) -> (i32, i32) {
    %c0_i32 = arith.constant 0 : i32
    %c0_i32_0 = arith.constant 0 : i32
    %c0_i32_1 = arith.constant 0 : i32
    return %c0_i32, %c0_i32_0 : i32, i32
  }
  func.func @transform_2(%arg0: i32) -> (i32, i32) {
    %c0_i32 = arith.constant 0 : i32
    %c0_i32_0 = arith.constant 0 : i32
    %c0_i32_1 = arith.constant 0 : i32
    return %c0_i32, %c0_i32_0 : i32, i32
  }
  func.func @transform_3(%arg0: i32) -> (i32, i32) {
    %c0_i32 = arith.constant 0 : i32
    %c0_i32_0 = arith.constant 0 : i32
    %c0_i32_1 = arith.constant 0 : i32
    return %c0_i32, %c0_i32_0 : i32, i32
  }
  func.func @transform_4(%arg0: i32) -> (i32, i32) {
    %c0_i32 = arith.constant 0 : i32
    %c0_i32_0 = arith.constant 0 : i32
    %c0_i32_1 = arith.constant 0 : i32
    return %c0_i32, %c0_i32_0 : i32, i32
  }
  func.func @transform_5(%arg0: i32) -> (i32, i32) {
    %c0_i32 = arith.constant 0 : i32
    %c0_i32_0 = arith.constant 0 : i32
    %c0_i32_1 = arith.constant 0 : i32
    return %c0_i32, %c0_i32_0 : i32, i32
  }
  func.func @transform_6(%arg0: i32) -> (i32, i32) {
    %c0_i32 = arith.constant 0 : i32
    %c0_i32_0 = arith.constant 0 : i32
    %c0_i32_1 = arith.constant 0 : i32
    return %c0_i32, %c0_i32_0 : i32, i32
  }
  func.func @transform_7(%arg0: i32) -> (i32, i32) {
    %c0_i32 = arith.constant 0 : i32
    %c0_i32_0 = arith.constant 0 : i32
    return %arg0, %c0_i32 : i32, i32
  }
}

module attributes {stable_mosaic.version = 11 : i64} {
  func.func @_policy_kernel_fused(%arg0: i32, %arg1: memref<8x16xf32, #tpu.memory_space<vmem>>, %arg2: memref<16x64xf32, #tpu.memory_space<vmem>>, %arg3: memref<1x64xf32, #tpu.memory_space<vmem>>, %arg4: memref<64x64xf32, #tpu.memory_space<vmem>>, %arg5: memref<1x64xf32, #tpu.memory_space<vmem>>, %arg6: memref<64x8xf32, #tpu.memory_space<vmem>>, %arg7: memref<3x8xf32, #tpu.memory_space<vmem>>, %arg8: memref<8x8xf32, #tpu.memory_space<vmem>>) attributes {dimension_semantics = [#tpu.dimension_semantics<parallel>], iteration_bounds = array<i64: 1>, scalar_prefetch = 0 : i64, scratch_operands = 0 : i64, tpu.core_type = #tpu.core_type<tc>, window_params = [{transform_indices = @transform_0, window_bounds = array<i64: 8, 16>}, {pipeline_mode = #tpu.pipeline_mode<synchronous>, transform_indices = @transform_1, window_bounds = array<i64: 16, 64>}, {pipeline_mode = #tpu.pipeline_mode<synchronous>, transform_indices = @transform_2, window_bounds = array<i64: 1, 64>}, {pipeline_mode = #tpu.pipeline_mode<synchronous>, transform_indices = @transform_3, window_bounds = array<i64: 64, 64>}, {pipeline_mode = #tpu.pipeline_mode<synchronous>, transform_indices = @transform_4, window_bounds = array<i64: 1, 64>}, {pipeline_mode = #tpu.pipeline_mode<synchronous>, transform_indices = @transform_5, window_bounds = array<i64: 64, 8>}, {pipeline_mode = #tpu.pipeline_mode<synchronous>, transform_indices = @transform_6, window_bounds = array<i64: 3, 8>}, {transform_indices = @transform_7, window_bounds = array<i64: 8, 8>}]} {
    %c0 = arith.constant 0 : index
    %c0_0 = arith.constant 0 : index
    %0 = vector.load %arg1[%c0, %c0_0] : memref<8x16xf32, #tpu.memory_space<vmem>>, vector<8x16xf32>
    %c0_1 = arith.constant 0 : index
    %c0_2 = arith.constant 0 : index
    %1 = vector.load %arg2[%c0_1, %c0_2] : memref<16x64xf32, #tpu.memory_space<vmem>>, vector<16x64xf32>
    %cst = arith.constant dense<0.000000e+00> : vector<8x64xf32>
    %2 = tpu.matmul %0, %1, %cst {dimension_numbers = #tpu.dot_dimension_numbers<[1], [0], [0], [1], [0, 0, 1, 1], [], []>} : vector<8x16xf32>, vector<16x64xf32>, vector<8x64xf32> -> vector<8x64xf32>
    %c0_3 = arith.constant 0 : index
    %c0_4 = arith.constant 0 : index
    %3 = vector.load %arg3[%c0_3, %c0_4] : memref<1x64xf32, #tpu.memory_space<vmem>>, vector<1x64xf32>
    %4 = vector.broadcast %3 : vector<1x64xf32> to vector<8x64xf32>
    %5 = arith.addf %2, %4 : vector<8x64xf32>
    %cst_5 = arith.constant 0.000000e+00 : f32
    %6 = vector.broadcast %cst_5 : f32 to vector<8x64xf32>
    %7 = arith.maximumf %5, %6 : vector<8x64xf32>
    %c0_6 = arith.constant 0 : index
    %c0_7 = arith.constant 0 : index
    %8 = vector.load %arg4[%c0_6, %c0_7] : memref<64x64xf32, #tpu.memory_space<vmem>>, vector<64x64xf32>
    %cst_8 = arith.constant dense<0.000000e+00> : vector<8x64xf32>
    %9 = tpu.matmul %7, %8, %cst_8 {dimension_numbers = #tpu.dot_dimension_numbers<[1], [0], [0], [1], [0, 0, 1, 1], [], []>} : vector<8x64xf32>, vector<64x64xf32>, vector<8x64xf32> -> vector<8x64xf32>
    %c0_9 = arith.constant 0 : index
    %c0_10 = arith.constant 0 : index
    %10 = vector.load %arg5[%c0_9, %c0_10] : memref<1x64xf32, #tpu.memory_space<vmem>>, vector<1x64xf32>
    %11 = vector.broadcast %10 : vector<1x64xf32> to vector<8x64xf32>
    %12 = arith.addf %9, %11 : vector<8x64xf32>
    %cst_11 = arith.constant 0.000000e+00 : f32
    %13 = vector.broadcast %cst_11 : f32 to vector<8x64xf32>
    %14 = arith.maximumf %12, %13 : vector<8x64xf32>
    %c0_12 = arith.constant 0 : index
    %c0_13 = arith.constant 0 : index
    %15 = vector.load %arg6[%c0_12, %c0_13] : memref<64x8xf32, #tpu.memory_space<vmem>>, vector<64x8xf32>
    %cst_14 = arith.constant dense<0.000000e+00> : vector<8x8xf32>
    %16 = tpu.matmul %14, %15, %cst_14 {dimension_numbers = #tpu.dot_dimension_numbers<[1], [0], [0], [1], [0, 0, 1, 1], [], []>} : vector<8x64xf32>, vector<64x8xf32>, vector<8x8xf32> -> vector<8x8xf32>
    %c0_15 = arith.constant 0 : index
    %c0_16 = arith.constant 0 : index
    %17 = vector.load %arg7[%c0_15, %c0_16] : memref<3x8xf32, #tpu.memory_space<vmem>>, vector<1x8xf32>
    %18 = vector.broadcast %17 : vector<1x8xf32> to vector<8x8xf32>
    %19 = arith.addf %16, %18 : vector<8x8xf32>
    %c1 = arith.constant 1 : index
    %c0_17 = arith.constant 0 : index
    %20 = vector.load %arg7[%c1, %c0_17] : memref<3x8xf32, #tpu.memory_space<vmem>>, vector<1x8xf32>
    %21 = vector.broadcast %20 : vector<1x8xf32> to vector<8x8xf32>
    %22 = arith.maximumf %19, %21 : vector<8x8xf32>
    %c2 = arith.constant 2 : index
    %c0_18 = arith.constant 0 : index
    %23 = vector.load %arg7[%c2, %c0_18] : memref<3x8xf32, #tpu.memory_space<vmem>>, vector<1x8xf32>
    %24 = vector.broadcast %23 : vector<1x8xf32> to vector<8x8xf32>
    %25 = arith.minimumf %22, %24 : vector<8x8xf32>
    %c0_19 = arith.constant 0 : index
    %c0_20 = arith.constant 0 : index
    %26 = vector.load %arg8[%c0_19, %c0_20] : memref<8x8xf32, #tpu.memory_space<vmem>>, vector<8x8xf32>
    tpu.vector_store %arg8[%c0_19, %c0_20], %25 {strides = array<i32>} : memref<8x8xf32, #tpu.memory_space<vmem>>, vector<8x8xf32>,
    return
  }
  func.func @transform_0(%arg0: i32) -> (i32, i32) {
    %c0_i32 = arith.constant 0 : i32
    %c0_i32_0 = arith.constant 0 : i32
    return %arg0, %c0_i32 : i32, i32
  }
  func.func @transform_1(%arg0: i32) -> (i32, i32) {
    %c0_i32 = arith.constant 0 : i32
    %c0_i32_0 = arith.constant 0 : i32
    %c0_i32_1 = arith.constant 0 : i32
    return %c0_i32, %c0_i32_0 : i32, i32
  }
  func.func @transform_2(%arg0: i32) -> (i32, i32) {
    %c0_i32 = arith.constant 0 : i32
    %c0_i32_0 = arith.constant 0 : i32
    %c0_i32_1 = arith.constant 0 : i32
    return %c0_i32, %c0_i32_0 : i32, i32
  }
  func.func @transform_3(%arg0: i32) -> (i32, i32) {
    %c0_i32 = arith.constant 0 : i32
    %c0_i32_0 = arith.constant 0 : i32
    %c0_i32_1 = arith.constant 0 : i32
    return %c0_i32, %c0_i32_0 : i32, i32
  }
  func.func @transform_4(%arg0: i32) -> (i32, i32) {
    %c0_i32 = arith.constant 0 : i32
    %c0_i32_0 = arith.constant 0 : i32
    %c0_i32_1 = arith.constant 0 : i32
    return %c0_i32, %c0_i32_0 : i32, i32
  }
  func.func @transform_5(%arg0: i32) -> (i32, i32) {
    %c0_i32 = arith.constant 0 : i32
    %c0_i32_0 = arith.constant 0 : i32
    %c0_i32_1 = arith.constant 0 : i32
    return %c0_i32, %c0_i32_0 : i32, i32
  }
  func.func @transform_6(%arg0: i32) -> (i32, i32) {
    %c0_i32 = arith.constant 0 : i32
    %c0_i32_0 = arith.constant 0 : i32
    %c0_i32_1 = arith.constant 0 : i32
    return %c0_i32, %c0_i32_0 : i32, i32
  }
  func.func @transform_7(%arg0: i32) -> (i32, i32) {
    %c0_i32 = arith.constant 0 : i32
    %c0_i32_0 = arith.constant 0 : i32
    return %arg0, %c0_i32 : i32, i32
  }
}

</mosaic_0001>

<llo_original>
// kernel: tpu_custom_call.1
$region0: #{tpu_custom_call.1}
  #allocation0 [shape = 'u32[]', space=smem, size = 0x4, offset = 0x4, fixed_abs, tag = 'smem constant byte address 0x4 - core index']
  #allocation1 [shape = 'u32[144,128]{1,0:T(1,128)}', space=vmem, size = 0x12000, scoped, tag = 'internal scratch']
  %s0 = inlined_call_operand.vmem [shape: f32[8,16], index: 0, kind: input, shape index: {}]
  %s1 = inlined_call_operand.hbm [shape: f32[16,64], index: 1, kind: input, shape index: {}]
  %s2 = inlined_call_operand.vmem [shape: f32[1,64], index: 2, kind: input, shape index: {}]
  %s3 = inlined_call_operand.vmem [shape: f32[64,64], index: 3, kind: input, shape index: {}]
  %s4 = inlined_call_operand.hbm [shape: f32[1,64], index: 4, kind: input, shape index: {}]
  %s5 = inlined_call_operand.vmem [shape: f32[64,8], index: 5, kind: input, shape index: {}]
  %s6 = inlined_call_operand.hbm [shape: f32[3,8], index: 6, kind: input, shape index: {}]
  %s7 = inlined_call_operand.hbm [shape: f32[8,8], index: 7, kind: output, shape index: {}]
  %s8 = sld [smem:[#allocation0]]
  $region50: #{tpu_custom_call.1} parent=0
    _
  %s10 = ssub.s32 1, %s8
  %s11 = scalar_select 0, %s10, %s8
  $region1: #{tpu_custom_call.1} parent=0
    #allocation2 [shape = 'u8[8192]{0}', space=vmem, size = 0x2000, scoped, tag = 'input window, operand 1, single buffered']
    #allocation3 [shape = 's32[1]{0}', space=sflag, size = 0x4, scoped, tag = 'scoped memory for tpu_custom_call.1']
    #allocation4 [shape = 's32[1]{0}', space=sflag, size = 0x4, scoped, tag = 'scoped memory for tpu_custom_call.1']
    #allocation5 [shape = 'u8[512]{0}', space=vmem, size = 0x400, scoped, tag = 'input window, operand 4, single buffered']
    #allocation6 [shape = 's32[1]{0}', space=sflag, size = 0x4, scoped, tag = 'scoped memory for tpu_custom_call.1']
    #allocation7 [shape = 'u8[2048]{0}', space=vmem, size = 0x800, scoped, tag = 'input window, operand 6, single buffered']
    #allocation8 [shape = 'u8[4096]{0}', space=vmem, size = 0x1000, scoped, tag = 'output window, operand 0, single buffered']
    %12 = vsyncpa [#allocation3], 0
    %13 = vsyncpa [#allocation6], 0
    %14 = vsyncpa [#allocation4], 0
    // Predicated region
    $region2: #{tpu_custom_call.1} parent=1 // pred_check
      _
    $region3: #{tpu_custom_call.1} parent=1 // pred_check_branch
      %16 = sbr.rel (0) target = $region5
    $region4: #{tpu_custom_call.1} parent=1 // pred_region
      _
    $region5: #{tpu_custom_call.1} parent=1 // pred_fallthru
      _
    // Predicated region
    $region6: #{tpu_custom_call.1} parent=1 // pred_check
      _
    $region7: #{tpu_custom_call.1} parent=1 // pred_check_branch
      %18 = sbr.rel (0) target = $region9
    $region8: #{tpu_custom_call.1} parent=1 // pred_region
      %s20 = ssub.s32 256, 256
      %21 = vsyncadd [#allocation3], %s20
      %s22 = sshll.u32 [#allocation2], 4
      %s23 = int_to_ptr.vmem [resolvable:$true] %s22
      %28 = dma.hbm_to_vmem [thread:$0]  %s1, 256, %s23, [#allocation3], 128, 128, 8
    $region9: #{tpu_custom_call.1} parent=1 // pred_fallthru
      _
    // Predicated region
    $region10: #{tpu_custom_call.1} parent=1 // pred_check
      _
    $region11: #{tpu_custom_call.1} parent=1 // pred_check_branch
      %30 = sbr.rel (0) target = $region13
    $region12: #{tpu_custom_call.1} parent=1 // pred_region
      _
    $region13: #{tpu_custom_call.1} parent=1 // pred_fallthru
      _
    // Predicated region
    $region14: #{tpu_custom_call.1} parent=1 // pred_check
      _
    $region15: #{tpu_custom_call.1} parent=1 // pred_check_branch
      %32 = sbr.rel (0) target = $region17
    $region16: #{tpu_custom_call.1} parent=1 // pred_region
      _
    $region17: #{tpu_custom_call.1} parent=1 // pred_fallthru
      _
    // Predicated region
    $region18: #{tpu_custom_call.1} parent=1 // pred_check
      _
    $region19: #{tpu_custom_call.1} parent=1 // pred_check_branch
      %34 = sbr.rel (0) target = $region21
    $region20: #{tpu_custom_call.1} parent=1 // pred_region
      %s36 = ssub.s32 16, 16
      %37 = vsyncadd [#allocation6], %s36
      %s39 = sshll.u32 [#allocation5], 4
      %s40 = int_to_ptr.vmem [resolvable:$true] %s39
      %42 = dma.hbm_to_vmem [thread:$0]  %s4, 16, %s40, [#allocation6]
    $region21: #{tpu_custom_call.1} parent=1 // pred_fallthru
      _
    // Predicated region
    $region22: #{tpu_custom_call.1} parent=1 // pred_check
      _
    $region23: #{tpu_custom_call.1} parent=1 // pred_check_branch
      %44 = sbr.rel (0) target = $region25
    $region24: #{tpu_custom_call.1} parent=1 // pred_region
      _
    $region25: #{tpu_custom_call.1} parent=1 // pred_fallthru
      _
    // Predicated region
    $region26: #{tpu_custom_call.1} parent=1 // pred_check
      _
    $region27: #{tpu_custom_call.1} parent=1 // pred_check_branch
      %46 = sbr.rel (0) target = $region29
    $region28: #{tpu_custom_call.1} parent=1 // pred_region
      %s48 = ssub.s32 64, 64
      %49 = vsyncadd [#allocation6], %s48
      %s51 = sshll.u32 [#allocation7], 4
      %s52 = int_to_ptr.vmem [resolvable:$true] %s51
      %54 = dma.hbm_to_vmem [thread:$0]  %s6, 64, %s52, [#allocation6]
    $region29: #{tpu_custom_call.1} parent=1 // pred_fallthru
      _
    // Predicated region
    $region30: #{tpu_custom_call.1} parent=1 // pred_check
      _
    $region31: #{tpu_custom_call.1} parent=1 // pred_check_branch
      %56 = sbr.rel (0) target = $region33
    $region32: #{tpu_custom_call.1} parent=1 // pred_region
      %57 = dma.done [#allocation3], 256
    $region33: #{tpu_custom_call.1} parent=1 // pred_fallthru
      _
    // Predicated region
    $region34: #{tpu_custom_call.1} parent=1 // pred_check
      _
    $region35: #{tpu_custom_call.1} parent=1 // pred_check_branch
      %59 = sbr.rel (0) target = $region37
    $region36: #{tpu_custom_call.1} parent=1 // pred_region
      %60 = dma.done [#allocation6], 16
    $region37: #{tpu_custom_call.1} parent=1 // pred_fallthru
      _
    // Predicated region
    $region38: #{tpu_custom_call.1} parent=1 // pred_check
      _
    $region39: #{tpu_custom_call.1} parent=1 // pred_check_branch
      %62 = sbr.rel (0) target = $region41
    $region40: #{tpu_custom_call.1} parent=1 // pred_region
      %63 = dma.done [#allocation6], 64
    $region41: #{tpu_custom_call.1} parent=1 // pred_fallthru
      _
    %v64 = vld [vmem:[%s0] sm:$0xff]
    %v65 = vld [vmem:[#allocation2] sm:$0xff]
    %v66 = vld [vmem:[#allocation2 + $0x8] sm:$0xff]
    %v67 = vld [vmem:[%s2] sm:$0x1]
    %v69 = vlaneseq
    %v70 = vshrl.u32 %v69, 7
    %v71 = vsub.s32 0, %v70
    %v72 = vrot.slane %v67, %v71
    %vm74 = vcmask 130048
    %v76 = vsel %vm74, %v64, 0
    %78 = vmatprep.subr.mxu0 0.0
    %79 = vmatpush1.msra.mxu0 0.0
    %80 = vmatprep.subr.mxu0 0.0
    %81 = vmatpush1.msra.mxu0 0.0
    %82 = vmatprep.subr.mxu0 0.0
    %83 = vmatpush1.msra.mxu0 0.0
    %84 = vmatprep.subr.mxu0 0.0
    %85 = vmatpush1.msra.mxu0 0.0
    %86 = vmatprep.subr.mxu0 0.0
    %87 = vmatpush1.msra.mxu0 0.0
    %88 = vmatprep.subr.mxu0 0.0
    %89 = vmatpush1.msra.mxu0 0.0
    %90 = vmatprep.subr.mxu0 0.0
    %91 = vmatpush1.msra.mxu0 0.0
    %92 = vmatprep.subr.mxu0 0.0
    %93 = vmatpush1.msra.mxu0 0.0
    %94 = vmatprep.subr.mxu0 0.0
    %95 = vmatpush1.msra.mxu0 0.0
    %96 = vmatprep.subr.mxu0 0.0
    %97 = vmatpush1.msra.mxu0 0.0
    %98 = vmatprep.subr.mxu0 0.0
    %99 = vmatpush1.msra.mxu0 0.0
    %100 = vmatprep.subr.mxu0 0.0
    %101 = vmatpush1.msra.mxu0 0.0
    %102 = vmatprep.subr.mxu0 0.0
    %103 = vmatpush1.msra.mxu0 0.0
    %104 = vmatprep.subr.mxu0 0.0
    %105 = vmatpush1.msra.mxu0 0.0
    %106 = vmatprep.subr.mxu0 0.0
    %107 = vmatpush1.msra.mxu0 %v66
    %108 = vmatprep.subr.mxu0 0.0
    %109 = vmatpush1.msra.mxu0 %v65
    %110 = vmatprep.subr.mxu0 0.0
    %111 = vmatpush2.msra.mxu0 0.0
    %112 = vmatprep.subr.mxu0 0.0
    %113 = vmatpush2.msra.mxu0 0.0
    %114 = vmatprep.subr.mxu0 0.0
    %115 = vmatpush2.msra.mxu0 0.0
    %116 = vmatprep.subr.mxu0 0.0
    %117 = vmatpush2.msra.mxu0 0.0
    %118 = vmatprep.subr.mxu0 0.0
    %119 = vmatpush2.msra.mxu0 0.0
    %120 = vmatprep.subr.mxu0 0.0
    %121 = vmatpush2.msra.mxu0 0.0
    %122 = vmatprep.subr.mxu0 0.0
    %123 = vmatpush2.msra.mxu0 0.0
    %124 = vmatprep.subr.mxu0 0.0
    %125 = vmatpush2.msra.mxu0 0.0
    %126 = vmatprep.subr.mxu0 0.0
    %127 = vmatpush2.msra.mxu0 0.0
    %128 = vmatprep.subr.mxu0 0.0
    %129 = vmatpush2.msra.mxu0 0.0
    %130 = vmatprep.subr.mxu0 0.0
    %131 = vmatpush2.msra.mxu0 0.0
    %132 = vmatprep.subr.mxu0 0.0
    %133 = vmatpush2.msra.mxu0 0.0
    %134 = vmatprep.subr.mxu0 0.0
    %135 = vmatpush2.msra.mxu0 0.0
    %136 = vmatprep.subr.mxu0 0.0
    %137 = vmatpush2.msra.mxu0 0.0
    %138 = vmatprep.subr.mxu0 0.0
    %139 = vmatpush2.msra.mxu0 0.0
    %140 = vmatprep.subr.mxu0 0.0
    %141 = vmatpush2.msra.mxu0 0.0
    %142 = vmatprep.mubr.f32.mxu0 0.0
    %143 = vmatmul.mubr.f32.gmra.mxu0 %v76
    %v144 = vpop.f32.mrf.mxu0
    %v145 = vadd.f32 %v72, %v144
    %v146 = vpop.f32.mrf.mxu0
    %147 = vdwg.mxu0
    %v148 = vmax.f32 %v145, 0.0
    %v149 = vld [vmem:[%s3] sm:$0xff]
    %v150 = vld [vmem:[%s3 + $0x8] sm:$0xff]
    %v151 = vld [vmem:[%s3 + $0x10] sm:$0xff]
    %v152 = vld [vmem:[%s3 + $0x18] sm:$0xff]
    %v153 = vld [vmem:[%s3 + $0x20] sm:$0xff]
    %v154 = vld [vmem:[%s3 + $0x28] sm:$0xff]
    %v155 = vld [vmem:[%s3 + $0x30] sm:$0xff]
    %v156 = vld [vmem:[%s3 + $0x38] sm:$0xff]
    %v157 = vld [vmem:[#allocation5] sm:$0x1]
    %v159 = vlaneseq
    %v160 = vshrl.u32 %v159, 7
    %v161 = vsub.s32 0, %v160
    %v162 = vrot.slane %v157, %v161
    %vm164 = vcmask 523264
    %v166 = vsel %vm164, %v148, 0
    %168 = vmatprep.subr.mxu0 0.0
    %169 = vmatpush1.msra.mxu0 0.0
    %170 = vmatprep.subr.mxu0 0.0
    %171 = vmatpush1.msra.mxu0 0.0
    %172 = vmatprep.subr.mxu0 0.0
    %173 = vmatpush1.msra.mxu0 0.0
    %174 = vmatprep.subr.mxu0 0.0
    %175 = vmatpush1.msra.mxu0 0.0
    %176 = vmatprep.subr.mxu0 0.0
    %177 = vmatpush1.msra.mxu0 0.0
    %178 = vmatprep.subr.mxu0 0.0
    %179 = vmatpush1.msra.mxu0 0.0
    %180 = vmatprep.subr.mxu0 0.0
    %181 = vmatpush1.msra.mxu0 0.0
    %182 = vmatprep.subr.mxu0 0.0
    %183 = vmatpush1.msra.mxu0 0.0
    %184 = vmatprep.subr.mxu0 0.0
    %185 = vmatpush1.msra.mxu0 %v156
    %186 = vmatprep.subr.mxu0 0.0
    %187 = vmatpush1.msra.mxu0 %v155
    %188 = vmatprep.subr.mxu0 0.0
    %189 = vmatpush1.msra.mxu0 %v154
    %190 = vmatprep.subr.mxu0 0.0
    %191 = vmatpush1.msra.mxu0 %v153
    %192 = vmatprep.subr.mxu0 0.0
    %193 = vmatpush1.msra.mxu0 %v152
    %194 = vmatprep.subr.mxu0 0.0
    %195 = vmatpush1.msra.mxu0 %v151
    %196 = vmatprep.subr.mxu0 0.0
    %197 = vmatpush1.msra.mxu0 %v150
    %198 = vmatprep.subr.mxu0 0.0
    %199 = vmatpush1.msra.mxu0 %v149
    %200 = vmatprep.subr.mxu0 0.0
    %201 = vmatpush2.msra.mxu0 0.0
    %202 = vmatprep.subr.mxu0 0.0
    %203 = vmatpush2.msra.mxu0 0.0
    %204 = vmatprep.subr.mxu0 0.0
    %205 = vmatpush2.msra.mxu0 0.0
    %206 = vmatprep.subr.mxu0 0.0
    %207 = vmatpush2.msra.mxu0 0.0
    %208 = vmatprep.subr.mxu0 0.0
    %209 = vmatpush2.msra.mxu0 0.0
    %210 = vmatprep.subr.mxu0 0.0
    %211 = vmatpush2.msra.mxu0 0.0
    %212 = vmatprep.subr.mxu0 0.0
    %213 = vmatpush2.msra.mxu0 0.0
    %214 = vmatprep.subr.mxu0 0.0
    %215 = vmatpush2.msra.mxu0 0.0
    %216 = vmatprep.subr.mxu0 0.0
    %217 = vmatpush2.msra.mxu0 0.0
    %218 = vmatprep.subr.mxu0 0.0
    %219 = vmatpush2.msra.mxu0 0.0
    %220 = vmatprep.subr.mxu0 0.0
    %221 = vmatpush2.msra.mxu0 0.0
    %222 = vmatprep.subr.mxu0 0.0
    %223 = vmatpush2.msra.mxu0 0.0
    %224 = vmatprep.subr.mxu0 0.0
    %225 = vmatpush2.msra.mxu0 0.0
    %226 = vmatprep.subr.mxu0 0.0
    %227 = vmatpush2.msra.mxu0 0.0
    %228 = vmatprep.subr.mxu0 0.0
    %229 = vmatpush2.msra.mxu0 0.0
    %230 = vmatprep.subr.mxu0 0.0
    %231 = vmatpush2.msra.mxu0 0.0
    %232 = vmatprep.mubr.f32.mxu0 0.0
    %233 = vmatmul.mubr.f32.gmra.mxu0 %v166
    %v234 = vpop.f32.mrf.mxu0
    %v235 = vadd.f32 %v162, %v234
    %v236 = vpop.f32.mrf.mxu0
    %237 = vdwg.mxu0
    %v238 = vmax.f32 %v235, 0.0
    %v239 = vld [vmem:[%s5] sm:$0xff]
    %v240 = vld [vmem:[%s5 + $0x8] sm:$0xff]
    %v241 = vld [vmem:[%s5 + $0x10] sm:$0xff]
    %v242 = vld [vmem:[%s5 + $0x18] sm:$0xff]
    %v243 = vld [vmem:[%s5 + $0x20] sm:$0xff]
    %v244 = vld [vmem:[%s5 + $0x28] sm:$0xff]
    %v245 = vld [vmem:[%s5 + $0x30] sm:$0xff]
    %v246 = vld [vmem:[%s5 + $0x38] sm:$0xff]
    %v247 = vld [vmem:[#allocation7] sm:$0x1]
    %v248 = vlaneseq
    %v249 = vshrl.u32 %v248, 7
    %v250 = vsub.s32 0, %v249
    %v251 = vrot.slane %v247, %v250
    %v253 = vsel %vm164, %v238, 0
    %255 = vmatprep.subr.mxu0 0.0
    %256 = vmatpush1.msra.mxu0 0.0
    %257 = vmatprep.subr.mxu0 0.0
    %258 = vmatpush1.msra.mxu0 0.0
    %259 = vmatprep.subr.mxu0 0.0
    %260 = vmatpush1.msra.mxu0 0.0
    %261 = vmatprep.subr.mxu0 0.0
    %262 = vmatpush1.msra.mxu0 0.0
    %263 = vmatprep.subr.mxu0 0.0
    %264 = vmatpush1.msra.mxu0 0.0
    %265 = vmatprep.subr.mxu0 0.0
    %266 = vmatpush1.msra.mxu0 0.0
    %267 = vmatprep.subr.mxu0 0.0
    %268 = vmatpush1.msra.mxu0 0.0
    %269 = vmatprep.subr.mxu0 0.0
    %270 = vmatpush1.msra.mxu0 0.0
    %271 = vmatprep.subr.mxu0 0.0
    %272 = vmatpush1.msra.mxu0 %v246
    %273 = vmatprep.subr.mxu0 0.0
    %274 = vmatpush1.msra.mxu0 %v245
    %275 = vmatprep.subr.mxu0 0.0
    %276 = vmatpush1.msra.mxu0 %v244
    %277 = vmatprep.subr.mxu0 0.0
    %278 = vmatpush1.msra.mxu0 %v243
    %279 = vmatprep.subr.mxu0 0.0
    %280 = vmatpush1.msra.mxu0 %v242
    %281 = vmatprep.subr.mxu0 0.0
    %282 = vmatpush1.msra.mxu0 %v241
    %283 = vmatprep.subr.mxu0 0.0
    %284 = vmatpush1.msra.mxu0 %v240
    %285 = vmatprep.subr.mxu0 0.0
    %286 = vmatpush1.msra.mxu0 %v239
    %287 = vmatprep.subr.mxu0 0.0
    %288 = vmatpush2.msra.mxu0 0.0
    %289 = vmatprep.subr.mxu0 0.0
    %290 = vmatpush2.msra.mxu0 0.0
    %291 = vmatprep.subr.mxu0 0.0
    %292 = vmatpush2.msra.mxu0 0.0
    %293 = vmatprep.subr.mxu0 0.0
    %294 = vmatpush2.msra.mxu0 0.0
    %295 = vmatprep.subr.mxu0 0.0
    %296 = vmatpush2.msra.mxu0 0.0
    %297 = vmatprep.subr.mxu0 0.0
    %298 = vmatpush2.msra.mxu0 0.0
    %299 = vmatprep.subr.mxu0 0.0
    %300 = vmatpush2.msra.mxu0 0.0
    %301 = vmatprep.subr.mxu0 0.0
    %302 = vmatpush2.msra.mxu0 0.0
    %303 = vmatprep.subr.mxu0 0.0
    %304 = vmatpush2.msra.mxu0 0.0
    %305 = vmatprep.subr.mxu0 0.0
    %306 = vmatpush2.msra.mxu0 0.0
    %307 = vmatprep.subr.mxu0 0.0
    %308 = vmatpush2.msra.mxu0 0.0
    %309 = vmatprep.subr.mxu0 0.0
    %310 = vmatpush2.msra.mxu0 0.0
    %311 = vmatprep.subr.mxu0 0.0
    %312 = vmatpush2.msra.mxu0 0.0
    %313 = vmatprep.subr.mxu0 0.0
    %314 = vmatpush2.msra.mxu0 0.0
    %315 = vmatprep.subr.mxu0 0.0
    %316 = vmatpush2.msra.mxu0 0.0
    %317 = vmatprep.subr.mxu0 0.0
    %318 = vmatpush2.msra.mxu0 0.0
    %319 = vmatprep.mubr.f32.mxu0 0.0
    %320 = vmatmul.mubr.f32.gmra.mxu0 %v253
    %v321 = vpop.f32.mrf.mxu0
    %v322 = vadd.f32 %v251, %v321
    %v323 = vpop.f32.mrf.mxu0
    %324 = vdwg.mxu0
    %v325 = vld [vmem:[#allocation7 + $0x1] sm:$0x1]
    %v326 = vlaneseq
    %v327 = vshrl.u32 %v326, 7
    %v328 = vsub.s32 0, %v327
    %v329 = vrot.slane %v325, %v328
    %v330 = vmax.f32 %v322, %v329
    %v331 = vld [vmem:[#allocation7 + $0x2] sm:$0x1]
    %v332 = vlaneseq
    %v333 = vshrl.u32 %v332, 7
    %v334 = vsub.s32 0, %v333
    %v335 = vrot.slane %v331, %v334
    %v336 = vmin.f32 %v330, %v335
    %vm337 = vcmask 64512
    %338 = vst.msk [vmem:[#allocation8] sm:$0xff] %vm337, %v336
    // Predicated region
    $region42: #{tpu_custom_call.1} parent=1 // pred_check
      _
    $region43: #{tpu_custom_call.1} parent=1 // pred_check_branch
      %340 = sbr.rel (0) target = $region45
    $region44: #{tpu_custom_call.1} parent=1 // pred_region
      %s342 = ssub.s32 128, 128
      %343 = vsyncadd [#allocation4], %s342
      %s345 = sshll.u32 [#allocation8], 4
      %s346 = int_to_ptr.vmem [resolvable:$true] %s345
      %348 = dma.vmem_to_hbm [thread:$0]  %s346, 128, %s7, [#allocation4]
    $region45: #{tpu_custom_call.1} parent=1 // pred_fallthru
      _
    // Predicated region
    $region46: #{tpu_custom_call.1} parent=1 // pred_check
      _
    $region47: #{tpu_custom_call.1} parent=1 // pred_check_branch
      %350 = sbr.rel (0) target = $region49
    $region48: #{tpu_custom_call.1} parent=1 // pred_region
      %351 = dma.done [#allocation4], 128
    $region49: #{tpu_custom_call.1} parent=1 // pred_fallthru
      _
    %352 = vsyncpa [#allocation3], 1
    %353 = vsyncpa [#allocation6], 1
    %354 = vsyncpa [#allocation4], 1

// kernel: tpu_custom_call.1
$region0: #{tpu_custom_call.1}
  #allocation0 [shape = 'u32[]', space=smem, size = 0x4, offset = 0x4, fixed_abs, tag = 'smem constant byte address 0x4 - core index']
  #allocation1 [shape = 'u32[144,128]{1,0:T(1,128)}', space=vmem, size = 0x12000, scoped, tag = 'internal scratch']
  %s0 = inlined_call_operand.vmem [shape: f32[8,16], index: 0, kind: input, shape index: {}]
  %s1 = inlined_call_operand.hbm [shape: f32[16,64], index: 1, kind: input, shape index: {}]
  %s2 = inlined_call_operand.vmem [shape: f32[1,64], index: 2, kind: input, shape index: {}]
  %s3 = inlined_call_operand.vmem [shape: f32[64,64], index: 3, kind: input, shape index: {}]
  %s4 = inlined_call_operand.hbm [shape: f32[1,64], index: 4, kind: input, shape index: {}]
  %s5 = inlined_call_operand.vmem [shape: f32[64,8], index: 5, kind: input, shape index: {}]
  %s6 = inlined_call_operand.hbm [shape: f32[3,8], index: 6, kind: input, shape index: {}]
  %s7 = inlined_call_operand.hbm [shape: f32[8,8], index: 7, kind: output, shape index: {}]
  %s8 = sld [smem:[#allocation0]]
  $region50: #{tpu_custom_call.1} parent=0
    _
  %s10 = ssub.s32 1, %s8
  %s11 = scalar_select 0, %s10, %s8
  $region1: #{tpu_custom_call.1} parent=0
    #allocation2 [shape = 'u8[8192]{0}', space=vmem, size = 0x2000, scoped, tag = 'input window, operand 1, single buffered']
    #allocation3 [shape = 's32[1]{0}', space=sflag, size = 0x4, scoped, tag = 'scoped memory for tpu_custom_call.1']
    #allocation4 [shape = 's32[1]{0}', space=sflag, size = 0x4, scoped, tag = 'scoped memory for tpu_custom_call.1']
    #allocation5 [shape = 'u8[512]{0}', space=vmem, size = 0x400, scoped, tag = 'input window, operand 4, single buffered']
    #allocation6 [shape = 's32[1]{0}', space=sflag, size = 0x4, scoped, tag = 'scoped memory for tpu_custom_call.1']
    #allocation7 [shape = 'u8[2048]{0}', space=vmem, size = 0x800, scoped, tag = 'input window, operand 6, single buffered']
    #allocation8 [shape = 'u8[4096]{0}', space=vmem, size = 0x1000, scoped, tag = 'output window, operand 0, single buffered']
    %12 = vsyncpa [#allocation3], 0
    %13 = vsyncpa [#allocation6], 0
    %14 = vsyncpa [#allocation4], 0
    // Predicated region
    $region2: #{tpu_custom_call.1} parent=1 // pred_check
      _
    $region3: #{tpu_custom_call.1} parent=1 // pred_check_branch
      %16 = sbr.rel (0) target = $region5
    $region4: #{tpu_custom_call.1} parent=1 // pred_region
      _
    $region5: #{tpu_custom_call.1} parent=1 // pred_fallthru
      _
    // Predicated region
    $region6: #{tpu_custom_call.1} parent=1 // pred_check
      _
    $region7: #{tpu_custom_call.1} parent=1 // pred_check_branch
      %18 = sbr.rel (0) target = $region9
    $region8: #{tpu_custom_call.1} parent=1 // pred_region
      %s20 = ssub.s32 256, 256
      %21 = vsyncadd [#allocation3], %s20
      %s22 = sshll.u32 [#allocation2], 4
      %s23 = int_to_ptr.vmem [resolvable:$true] %s22
      %28 = dma.hbm_to_vmem [thread:$0]  %s1, 256, %s23, [#allocation3], 128, 128, 8
    $region9: #{tpu_custom_call.1} parent=1 // pred_fallthru
      _
    // Predicated region
    $region10: #{tpu_custom_call.1} parent=1 // pred_check
      _
    $region11: #{tpu_custom_call.1} parent=1 // pred_check_branch
      %30 = sbr.rel (0) target = $region13
    $region12: #{tpu_custom_call.1} parent=1 // pred_region
      _
    $region13: #{tpu_custom_call.1} parent=1 // pred_fallthru
      _
    // Predicated region
    $region14: #{tpu_custom_call.1} parent=1 // pred_check
      _
    $region15: #{tpu_custom_call.1} parent=1 // pred_check_branch
      %32 = sbr.rel (0) target = $region17
    $region16: #{tpu_custom_call.1} parent=1 // pred_region
      _
    $region17: #{tpu_custom_call.1} parent=1 // pred_fallthru
      _
    // Predicated region
    $region18: #{tpu_custom_call.1} parent=1 // pred_check
      _
    $region19: #{tpu_custom_call.1} parent=1 // pred_check_branch
      %34 = sbr.rel (0) target = $region21
    $region20: #{tpu_custom_call.1} parent=1 // pred_region
      %s36 = ssub.s32 16, 16
      %37 = vsyncadd [#allocation6], %s36
      %s39 = sshll.u32 [#allocation5], 4
      %s40 = int_to_ptr.vmem [resolvable:$true] %s39
      %42 = dma.hbm_to_vmem [thread:$0]  %s4, 16, %s40, [#allocation6]
    $region21: #{tpu_custom_call.1} parent=1 // pred_fallthru
      _
    // Predicated region
    $region22: #{tpu_custom_call.1} parent=1 // pred_check
      _
    $region23: #{tpu_custom_call.1} parent=1 // pred_check_branch
      %44 = sbr.rel (0) target = $region25
    $region24: #{tpu_custom_call.1} parent=1 // pred_region
      _
    $region25: #{tpu_custom_call.1} parent=1 // pred_fallthru
      _
    // Predicated region
    $region26: #{tpu_custom_call.1} parent=1 // pred_check
      _
    $region27: #{tpu_custom_call.1} parent=1 // pred_check_branch
      %46 = sbr.rel (0) target = $region29
    $region28: #{tpu_custom_call.1} parent=1 // pred_region
      %s48 = ssub.s32 64, 64
      %49 = vsyncadd [#allocation6], %s48
      %s51 = sshll.u32 [#allocation7], 4
      %s52 = int_to_ptr.vmem [resolvable:$true] %s51
      %54 = dma.hbm_to_vmem [thread:$0]  %s6, 64, %s52, [#allocation6]
    $region29: #{tpu_custom_call.1} parent=1 // pred_fallthru
      _
    // Predicated region
    $region30: #{tpu_custom_call.1} parent=1 // pred_check
      _
    $region31: #{tpu_custom_call.1} parent=1 // pred_check_branch
      %56 = sbr.rel (0) target = $region33
    $region32: #{tpu_custom_call.1} parent=1 // pred_region
      %57 = dma.done [#allocation3], 256
    $region33: #{tpu_custom_call.1} parent=1 // pred_fallthru
      _
    // Predicated region
    $region34: #{tpu_custom_call.1} parent=1 // pred_check
      _
    $region35: #{tpu_custom_call.1} parent=1 // pred_check_branch
      %59 = sbr.rel (0) target = $region37
    $region36: #{tpu_custom_call.1} parent=1 // pred_region
      %60 = dma.done [#allocation6], 16
    $region37: #{tpu_custom_call.1} parent=1 // pred_fallthru
      _
    // Predicated region
    $region38: #{tpu_custom_call.1} parent=1 // pred_check
      _
    $region39: #{tpu_custom_call.1} parent=1 // pred_check_branch
      %62 = sbr.rel (0) target = $region41
    $region40: #{tpu_custom_call.1} parent=1 // pred_region
      %63 = dma.done [#allocation6], 64
    $region41: #{tpu_custom_call.1} parent=1 // pred_fallthru
      _
    %v64 = vld [vmem:[%s0] sm:$0xff]
    %v65 = vld [vmem:[#allocation2] sm:$0xff]
    %v66 = vld [vmem:[#allocation2 + $0x8] sm:$0xff]
    %v67 = vld [vmem:[%s2] sm:$0x1]
    %v69 = vlaneseq
    %v70 = vshrl.u32 %v69, 7
    %v71 = vsub.s32 0, %v70
    %v72 = vrot.slane %v67, %v71
    %vm74 = vcmask 130048
    %v76 = vsel %vm74, %v64, 0
    %78 = vmatprep.subr.mxu0 0.0
    %79 = vmatpush1.msra.mxu0 0.0
    %80 = vmatprep.subr.mxu0 0.0
    %81 = vmatpush1.msra.mxu0 0.0
    %82 = vmatprep.subr.mxu0 0.0
    %83 = vmatpush1.msra.mxu0 0.0
    %84 = vmatprep.subr.mxu0 0.0
    %85 = vmatpush1.msra.mxu0 0.0
    %86 = vmatprep.subr.mxu0 0.0
    %87 = vmatpush1.msra.mxu0 0.0
    %88 = vmatprep.subr.mxu0 0.0
    %89 = vmatpush1.msra.mxu0 0.0
    %90 = vmatprep.subr.mxu0 0.0
    %91 = vmatpush1.msra.mxu0 0.0
    %92 = vmatprep.subr.mxu0 0.0
    %93 = vmatpush1.msra.mxu0 0.0
    %94 = vmatprep.subr.mxu0 0.0
    %95 = vmatpush1.msra.mxu0 0.0
    %96 = vmatprep.subr.mxu0 0.0
    %97 = vmatpush1.msra.mxu0 0.0
    %98 = vmatprep.subr.mxu0 0.0
    %99 = vmatpush1.msra.mxu0 0.0
    %100 = vmatprep.subr.mxu0 0.0
    %101 = vmatpush1.msra.mxu0 0.0
    %102 = vmatprep.subr.mxu0 0.0
    %103 = vmatpush1.msra.mxu0 0.0
    %104 = vmatprep.subr.mxu0 0.0
    %105 = vmatpush1.msra.mxu0 0.0
    %106 = vmatprep.subr.mxu0 0.0
    %107 = vmatpush1.msra.mxu0 %v66
    %108 = vmatprep.subr.mxu0 0.0
    %109 = vmatpush1.msra.mxu0 %v65
    %110 = vmatprep.subr.mxu0 0.0
    %111 = vmatpush2.msra.mxu0 0.0
    %112 = vmatprep.subr.mxu0 0.0
    %113 = vmatpush2.msra.mxu0 0.0
    %114 = vmatprep.subr.mxu0 0.0
    %115 = vmatpush2.msra.mxu0 0.0
    %116 = vmatprep.subr.mxu0 0.0
    %117 = vmatpush2.msra.mxu0 0.0
    %118 = vmatprep.subr.mxu0 0.0
    %119 = vmatpush2.msra.mxu0 0.0
    %120 = vmatprep.subr.mxu0 0.0
    %121 = vmatpush2.msra.mxu0 0.0
    %122 = vmatprep.subr.mxu0 0.0
    %123 = vmatpush2.msra.mxu0 0.0
    %124 = vmatprep.subr.mxu0 0.0
    %125 = vmatpush2.msra.mxu0 0.0
    %126 = vmatprep.subr.mxu0 0.0
    %127 = vmatpush2.msra.mxu0 0.0
    %128 = vmatprep.subr.mxu0 0.0
    %129 = vmatpush2.msra.mxu0 0.0
    %130 = vmatprep.subr.mxu0 0.0
    %131 = vmatpush2.msra.mxu0 0.0
    %132 = vmatprep.subr.mxu0 0.0
    %133 = vmatpush2.msra.mxu0 0.0
    %134 = vmatprep.subr.mxu0 0.0
    %135 = vmatpush2.msra.mxu0 0.0
    %136 = vmatprep.subr.mxu0 0.0
    %137 = vmatpush2.msra.mxu0 0.0
    %138 = vmatprep.subr.mxu0 0.0
    %139 = vmatpush2.msra.mxu0 0.0
    %140 = vmatprep.subr.mxu0 0.0
    %141 = vmatpush2.msra.mxu0 0.0
    %142 = vmatprep.mubr.f32.mxu0 0.0
    %143 = vmatmul.mubr.f32.gmra.mxu0 %v76
    %v144 = vpop.f32.mrf.mxu0
    %v145 = vadd.f32 %v72, %v144
    %v146 = vpop.f32.mrf.mxu0
    %147 = vdwg.mxu0
    %v148 = vmax.f32 %v145, 0.0
    %v149 = vld [vmem:[%s3] sm:$0xff]
    %v150 = vld [vmem:[%s3 + $0x8] sm:$0xff]
    %v151 = vld [vmem:[%s3 + $0x10] sm:$0xff]
    %v152 = vld [vmem:[%s3 + $0x18] sm:$0xff]
    %v153 = vld [vmem:[%s3 + $0x20] sm:$0xff]
    %v154 = vld [vmem:[%s3 + $0x28] sm:$0xff]
    %v155 = vld [vmem:[%s3 + $0x30] sm:$0xff]
    %v156 = vld [vmem:[%s3 + $0x38] sm:$0xff]
    %v157 = vld [vmem:[#allocation5] sm:$0x1]
    %v159 = vlaneseq
    %v160 = vshrl.u32 %v159, 7
    %v161 = vsub.s32 0, %v160
    %v162 = vrot.slane %v157, %v161
    %vm164 = vcmask 523264
    %v166 = vsel %vm164, %v148, 0
    %168 = vmatprep.subr.mxu0 0.0
    %169 = vmatpush1.msra.mxu0 0.0
    %170 = vmatprep.subr.mxu0 0.0
    %171 = vmatpush1.msra.mxu0 0.0
    %172 = vmatprep.subr.mxu0 0.0
    %173 = vmatpush1.msra.mxu0 0.0
    %174 = vmatprep.subr.mxu0 0.0
    %175 = vmatpush1.msra.mxu0 0.0
    %176 = vmatprep.subr.mxu0 0.0
    %177 = vmatpush1.msra.mxu0 0.0
    %178 = vmatprep.subr.mxu0 0.0
    %179 = vmatpush1.msra.mxu0 0.0
    %180 = vmatprep.subr.mxu0 0.0
    %181 = vmatpush1.msra.mxu0 0.0
    %182 = vmatprep.subr.mxu0 0.0
    %183 = vmatpush1.msra.mxu0 0.0
    %184 = vmatprep.subr.mxu0 0.0
    %185 = vmatpush1.msra.mxu0 %v156
    %186 = vmatprep.subr.mxu0 0.0
    %187 = vmatpush1.msra.mxu0 %v155
    %188 = vmatprep.subr.mxu0 0.0
    %189 = vmatpush1.msra.mxu0 %v154
    %190 = vmatprep.subr.mxu0 0.0
    %191 = vmatpush1.msra.mxu0 %v153
    %192 = vmatprep.subr.mxu0 0.0
    %193 = vmatpush1.msra.mxu0 %v152
    %194 = vmatprep.subr.mxu0 0.0
    %195 = vmatpush1.msra.mxu0 %v151
    %196 = vmatprep.subr.mxu0 0.0
    %197 = vmatpush1.msra.mxu0 %v150
    %198 = vmatprep.subr.mxu0 0.0
    %199 = vmatpush1.msra.mxu0 %v149
    %200 = vmatprep.subr.mxu0 0.0
    %201 = vmatpush2.msra.mxu0 0.0
    %202 = vmatprep.subr.mxu0 0.0
    %203 = vmatpush2.msra.mxu0 0.0
    %204 = vmatprep.subr.mxu0 0.0
    %205 = vmatpush2.msra.mxu0 0.0
    %206 = vmatprep.subr.mxu0 0.0
    %207 = vmatpush2.msra.mxu0 0.0
    %208 = vmatprep.subr.mxu0 0.0
    %209 = vmatpush2.msra.mxu0 0.0
    %210 = vmatprep.subr.mxu0 0.0
    %211 = vmatpush2.msra.mxu0 0.0
    %212 = vmatprep.subr.mxu0 0.0
    %213 = vmatpush2.msra.mxu0 0.0
    %214 = vmatprep.subr.mxu0 0.0
    %215 = vmatpush2.msra.mxu0 0.0
    %216 = vmatprep.subr.mxu0 0.0
    %217 = vmatpush2.msra.mxu0 0.0
    %218 = vmatprep.subr.mxu0 0.0
    %219 = vmatpush2.msra.mxu0 0.0
    %220 = vmatprep.subr.mxu0 0.0
    %221 = vmatpush2.msra.mxu0 0.0
    %222 = vmatprep.subr.mxu0 0.0
    %223 = vmatpush2.msra.mxu0 0.0
    %224 = vmatprep.subr.mxu0 0.0
    %225 = vmatpush2.msra.mxu0 0.0
    %226 = vmatprep.subr.mxu0 0.0
    %227 = vmatpush2.msra.mxu0 0.0
    %228 = vmatprep.subr.mxu0 0.0
    %229 = vmatpush2.msra.mxu0 0.0
    %230 = vmatprep.subr.mxu0 0.0
    %231 = vmatpush2.msra.mxu0 0.0
    %232 = vmatprep.mubr.f32.mxu0 0.0
    %233 = vmatmul.mubr.f32.gmra.mxu0 %v166
    %v234 = vpop.f32.mrf.mxu0
    %v235 = vadd.f32 %v162, %v234
    %v236 = vpop.f32.mrf.mxu0
    %237 = vdwg.mxu0
    %v238 = vmax.f32 %v235, 0.0
    %v239 = vld [vmem:[%s5] sm:$0xff]
    %v240 = vld [vmem:[%s5 + $0x8] sm:$0xff]
    %v241 = vld [vmem:[%s5 + $0x10] sm:$0xff]
    %v242 = vld [vmem:[%s5 + $0x18] sm:$0xff]
    %v243 = vld [vmem:[%s5 + $0x20] sm:$0xff]
    %v244 = vld [vmem:[%s5 + $0x28] sm:$0xff]
    %v245 = vld [vmem:[%s5 + $0x30] sm:$0xff]
    %v246 = vld [vmem:[%s5 + $0x38] sm:$0xff]
    %v247 = vld [vmem:[#allocation7] sm:$0x1]
    %v248 = vlaneseq
    %v249 = vshrl.u32 %v248, 7
    %v250 = vsub.s32 0, %v249
    %v251 = vrot.slane %v247, %v250
    %v253 = vsel %vm164, %v238, 0
    %255 = vmatprep.subr.mxu0 0.0
    %256 = vmatpush1.msra.mxu0 0.0
    %257 = vmatprep.subr.mxu0 0.0
    %258 = vmatpush1.msra.mxu0 0.0
    %259 = vmatprep.subr.mxu0 0.0
    %260 = vmatpush1.msra.mxu0 0.0
    %261 = vmatprep.subr.mxu0 0.0
    %262 = vmatpush1.msra.mxu0 0.0
    %263 = vmatprep.subr.mxu0 0.0
    %264 = vmatpush1.msra.mxu0 0.0
    %265 = vmatprep.subr.mxu0 0.0
    %266 = vmatpush1.msra.mxu0 0.0
    %267 = vmatprep.subr.mxu0 0.0
    %268 = vmatpush1.msra.mxu0 0.0
    %269 = vmatprep.subr.mxu0 0.0
    %270 = vmatpush1.msra.mxu0 0.0
    %271 = vmatprep.subr.mxu0 0.0
    %272 = vmatpush1.msra.mxu0 %v246
    %273 = vmatprep.subr.mxu0 0.0
    %274 = vmatpush1.msra.mxu0 %v245
    %275 = vmatprep.subr.mxu0 0.0
    %276 = vmatpush1.msra.mxu0 %v244
    %277 = vmatprep.subr.mxu0 0.0
    %278 = vmatpush1.msra.mxu0 %v243
    %279 = vmatprep.subr.mxu0 0.0
    %280 = vmatpush1.msra.mxu0 %v242
    %281 = vmatprep.subr.mxu0 0.0
    %282 = vmatpush1.msra.mxu0 %v241
    %283 = vmatprep.subr.mxu0 0.0
    %284 = vmatpush1.msra.mxu0 %v240
    %285 = vmatprep.subr.mxu0 0.0
    %286 = vmatpush1.msra.mxu0 %v239
    %287 = vmatprep.subr.mxu0 0.0
    %288 = vmatpush2.msra.mxu0 0.0
    %289 = vmatprep.subr.mxu0 0.0
    %290 = vmatpush2.msra.mxu0 0.0
    %291 = vmatprep.subr.mxu0 0.0
    %292 = vmatpush2.msra.mxu0 0.0
    %293 = vmatprep.subr.mxu0 0.0
    %294 = vmatpush2.msra.mxu0 0.0
    %295 = vmatprep.subr.mxu0 0.0
    %296 = vmatpush2.msra.mxu0 0.0
    %297 = vmatprep.subr.mxu0 0.0
    %298 = vmatpush2.msra.mxu0 0.0
    %299 = vmatprep.subr.mxu0 0.0
    %300 = vmatpush2.msra.mxu0 0.0
    %301 = vmatprep.subr.mxu0 0.0
    %302 = vmatpush2.msra.mxu0 0.0
    %303 = vmatprep.subr.mxu0 0.0
    %304 = vmatpush2.msra.mxu0 0.0
    %305 = vmatprep.subr.mxu0 0.0
    %306 = vmatpush2.msra.mxu0 0.0
    %307 = vmatprep.subr.mxu0 0.0
    %308 = vmatpush2.msra.mxu0 0.0
    %309 = vmatprep.subr.mxu0 0.0
    %310 = vmatpush2.msra.mxu0 0.0
    %311 = vmatprep.subr.mxu0 0.0
    %312 = vmatpush2.msra.mxu0 0.0
    %313 = vmatprep.subr.mxu0 0.0
    %314 = vmatpush2.msra.mxu0 0.0
    %315 = vmatprep.subr.mxu0 0.0
    %316 = vmatpush2.msra.mxu0 0.0
    %317 = vmatprep.subr.mxu0 0.0
    %318 = vmatpush2.msra.mxu0 0.0
    %319 = vmatprep.mubr.f32.mxu0 0.0
    %320 = vmatmul.mubr.f32.gmra.mxu0 %v253
    %v321 = vpop.f32.mrf.mxu0
    %v322 = vadd.f32 %v251, %v321
    %v323 = vpop.f32.mrf.mxu0
    %324 = vdwg.mxu0
    %v325 = vld [vmem:[#allocation7 + $0x1] sm:$0x1]
    %v326 = vlaneseq
    %v327 = vshrl.u32 %v326, 7
    %v328 = vsub.s32 0, %v327
    %v329 = vrot.slane %v325, %v328
    %v330 = vmax.f32 %v322, %v329
    %v331 = vld [vmem:[#allocation7 + $0x2] sm:$0x1]
    %v332 = vlaneseq
    %v333 = vshrl.u32 %v332, 7
    %v334 = vsub.s32 0, %v333
    %v335 = vrot.slane %v331, %v334
    %v336 = vmin.f32 %v330, %v335
    %vm337 = vcmask 64512
    %338 = vst.msk [vmem:[#allocation8] sm:$0xff] %vm337, %v336
    // Predicated region
    $region42: #{tpu_custom_call.1} parent=1 // pred_check
      _
    $region43: #{tpu_custom_call.1} parent=1 // pred_check_branch
      %340 = sbr.rel (0) target = $region45
    $region44: #{tpu_custom_call.1} parent=1 // pred_region
      %s342 = ssub.s32 128, 128
      %343 = vsyncadd [#allocation4], %s342
      %s345 = sshll.u32 [#allocation8], 4
      %s346 = int_to_ptr.vmem [resolvable:$true] %s345
      %348 = dma.vmem_to_hbm [thread:$0]  %s346, 128, %s7, [#allocation4]
    $region45: #{tpu_custom_call.1} parent=1 // pred_fallthru
      _
    // Predicated region
    $region46: #{tpu_custom_call.1} parent=1 // pred_check
      _
    $region47: #{tpu_custom_call.1} parent=1 // pred_check_branch
      %350 = sbr.rel (0) target = $region49
    $region48: #{tpu_custom_call.1} parent=1 // pred_region
      %351 = dma.done [#allocation4], 128
    $region49: #{tpu_custom_call.1} parent=1 // pred_fallthru
      _
    %352 = vsyncpa [#allocation3], 1
    %353 = vsyncpa [#allocation6], 1
    %354 = vsyncpa [#allocation4], 1

</llo_original>
